<compile_context>
chip_gen: v5e
topology: v5e:2x2
jax: 0.10.0
libtpu: 0.0.40
codegen_flags: <defaults>
</compile_context>

<pallas_src>
import jax
import jax.numpy as jnp
from jax.experimental import pallas as pl
from jax.experimental.pallas import tpu as pltpu

_LANE = 128      # vreg lane width  -> lane-dense last dim, unmasked stores
_SUBLANE = 8     # vreg sublane count -> row-tile granularity
_MAX_TM = 2048   # rows per tile: 2048*128*4B = 1 MiB per buffer, double-buffered
                 # in/out = 4 MiB, far under the 32 MiB scoped-VMEM default.


# ----------------------------- Pallas kernel --------------------------------
def _identity_copy_kernel(x_ref, o_ref):
    # Straight tile copy; VMEM load + store, no compute.
    o_ref[...] = x_ref[...]


# ------------------------------ wrapper --------------------------------------
@jax.jit
def empty_layer_forward(x):
    """EmptyLayer.forward: identity.  Tiled lane-dense copy through VMEM."""
    orig_shape = x.shape
    orig_dtype = x.dtype

    flat = x.reshape(-1)
    n = flat.shape[0]

    # View as (rows, 128) so the last dim is lane-dense.
    rows = -(-n // _LANE)                                   # cdiv
    tm = min(_MAX_TM, -(-rows // _SUBLANE) * _SUBLANE)      # multiple of 8
    rows_pad = -(-rows // tm) * tm
    pad = rows_pad * _LANE - n
    if pad:
        flat = jnp.pad(flat, (0, pad))
    x2 = flat.reshape(rows_pad, _LANE)

    grid = (rows_pad // tm,)
    out = pl.pallas_call(
        _identity_copy_kernel,
        out_shape=jax.ShapeDtypeStruct((rows_pad, _LANE), orig_dtype),
        grid_spec=pltpu.PrefetchScalarGridSpec(
            num_scalar_prefetch=0,
            grid=grid,
            in_specs=[pl.BlockSpec((tm, _LANE), lambda i: (i, 0))],
            out_specs=pl.BlockSpec((tm, _LANE), lambda i: (i, 0)),
        ),
        compiler_params=pltpu.CompilerParams(
            dimension_semantics=("parallel",)),   # megacore-shardable on v7x
    )(x2)

    out = out.reshape(-1)
    if pad:
        out = out[:n]
    return out.reshape(orig_shape)


# ------------------------------- main ----------------------------------------
if __name__ == "__main__":
    key = jax.random.PRNGKey(0)
    # Shapes consistent with a detector feature map entering a route/shortcut
    # placeholder: [N, C, H, W] = [2, 4, 16, 16].
    x = jax.random.normal(key, (2, 4, 16, 16), dtype=jnp.float32)

    y = empty_layer_forward(x)
    y = jax.block_until_ready(y)

    assert y.shape == x.shape
    assert y.dtype == x.dtype
    assert bool(jnp.array_equal(y, x))  # exact identity, bit-for-bit

    print("KERNEL_OK")
</pallas_src>

<mosaic_0001>
module attributes {stable_mosaic.version = 11 : i64} {
  func.func @_identity_copy_kernel(%arg0: i32, %arg1: memref<16x128xf32, #tpu.memory_space<vmem>>, %arg2: memref<16x128xf32, #tpu.memory_space<vmem>>) attributes {dimension_semantics = [#tpu.dimension_semantics<parallel>], iteration_bounds = array<i64: 1>, scalar_prefetch = 0 : i64, scratch_operands = 0 : i64, tpu.core_type = #tpu.core_type<tc>, window_params = [{transform_indices = @transform_0, window_bounds = array<i64: 16, 128>}, {transform_indices = @transform_1, window_bounds = array<i64: 16, 128>}]} {
    %c0 = arith.constant 0 : index
    %c0_0 = arith.constant 0 : index
    %0 = vector.load %arg1[%c0, %c0_0] : memref<16x128xf32, #tpu.memory_space<vmem>>, vector<16x128xf32>
    %c0_1 = arith.constant 0 : index
    %c0_2 = arith.constant 0 : index
    %1 = vector.load %arg2[%c0_1, %c0_2] : memref<16x128xf32, #tpu.memory_space<vmem>>, vector<16x128xf32>
    tpu.vector_store %arg2[%c0_1, %c0_2], %0 {strides = array<i32>} : memref<16x128xf32, #tpu.memory_space<vmem>>, vector<16x128xf32>,
    return
  }
  func.func @transform_0(%arg0: i32) -> (i32, i32) {
    %c0_i32 = arith.constant 0 : i32
    %c0_i32_0 = arith.constant 0 : i32
    return %arg0, %c0_i32 : i32, i32
  }
  func.func @transform_1(%arg0: i32) -> (i32, i32) {
    %c0_i32 = arith.constant 0 : i32
    %c0_i32_0 = arith.constant 0 : i32
    return %arg0, %c0_i32 : i32, i32
  }
}

</mosaic_0001>

<llo_original>
// kernel: empty_layer_forward.1
$region0: #{empty_layer_forward.1}
  #allocation0 [shape = 'u32[]', space=smem, size = 0x4, offset = 0x4, fixed_abs, tag = 'smem constant byte address 0x4 - core index']
  #allocation1 [shape = 'u32[72,128]{1,0:T(1,128)}', space=vmem, size = 0x9000, scoped, tag = 'internal scratch']
  %s0 = inlined_call_operand.vmem [shape: f32[16,128], index: 0, kind: input, shape index: {}]
  %s1 = inlined_call_operand.vmem [shape: f32[16,128], index: 1, kind: output, shape index: {}]
  %s2 = sld [smem:[#allocation0]]
  $region14: #{empty_layer_forward.1} parent=0
    _
  %s4 = ssub.s32 1, %s2
  %s5 = scalar_select 0, %s4, %s2
  // Predicated region
  $region2: #{empty_layer_forward.1} parent=0 // pred_check
    _
  $region3: #{empty_layer_forward.1} parent=0 // pred_check_branch
    %7 = sbr.rel (0) target = $region5
  $region4: #{empty_layer_forward.1} parent=0 // pred_region
    _
  $region5: #{empty_layer_forward.1} parent=0 // pred_fallthru
    _
  %v8 = vld [vmem:[%s0] sm:$0xff]
  %v9 = vld [vmem:[%s0 + $0x8] sm:$0xff]
  %10 = vst [vmem:[%s1] sm:$0xff] %v8
  %11 = vst [vmem:[%s1 + $0x8] sm:$0xff] %v9
  // Predicated region
  $region6: #{empty_layer_forward.1} parent=0 // pred_check
    _
  $region7: #{empty_layer_forward.1} parent=0 // pred_check_branch
    %13 = sbr.rel (0) target = $region9
  $region8: #{empty_layer_forward.1} parent=0 // pred_region
    _
  $region9: #{empty_layer_forward.1} parent=0 // pred_fallthru
    _
  // Predicated region
  $region10: #{empty_layer_forward.1} parent=0 // pred_check
    _
  $region11: #{empty_layer_forward.1} parent=0 // pred_check_branch
    %15 = sbr.rel (0) target = $region13
  $region12: #{empty_layer_forward.1} parent=0 // pred_region
    _
  $region13: #{empty_layer_forward.1} parent=0 // pred_fallthru
    _

</llo_original>
